<compile_context>
chip_gen: v5e
topology: v5e:2x2
jax: 0.10.0
libtpu: 0.0.40
codegen_flags: <defaults>
</compile_context>

<pallas_src>
import jax
import jax.numpy as jnp
from jax import lax
from jax.experimental import pallas as pl
from jax.experimental.pallas import tpu as pltpu


LAYER_NORM_EPS = 1e-12  # BERT default


def _round_up(x, m):
    return (x + m - 1) // m * m


def bert_output_kernel(hs_ref, inp_ref, w_ref, b_ref, gamma_ref, beta_ref, out_ref):
    # dense: [TM, I](bf16) @ [I, H](bf16) -> f32 accumulator on the MXU
    x = jnp.dot(hs_ref[...], w_ref[...], preferred_element_type=jnp.float32)
    # bias + residual add in f32 (dropout(eval) = identity; clamp_inf is a no-op for f32)
    y = x + b_ref[...] + inp_ref[...].astype(jnp.float32)

    # LayerNorm over the last (hidden) axis, stats in f32.
    mean = jnp.mean(y, axis=-1, keepdims=True)
    centered = y - mean
    var = jnp.mean(centered * centered, axis=-1, keepdims=True)
    norm = centered * lax.rsqrt(var + LAYER_NORM_EPS)
    out_ref[...] = (norm * gamma_ref[...] + beta_ref[...]).astype(out_ref.dtype)


def bert_output(hidden_states, input_tensor, w, b, gamma, beta, *, tm=256):
    """hidden_states: [B, S, I], input_tensor: [B, S, H]. Returns [B, S, H].

    tm: token-tile size. Tuning guide: 128/256 on v5e, 256-1024 on v6e,
    256-512 on v7x (64 MiB VMEM). Default 256 is a safe cross-generation choice.
    """
    B, S, I = hidden_states.shape
    H = input_tensor.shape[-1]
    T = B * S

    hs2d = hidden_states.reshape(T, I)
    in2d = input_tensor.reshape(T, H)

    # Pick the token tile and pad the token axis so the grid divides evenly.
    if T >= tm:
        T_pad = _round_up(T, tm)
    else:
        T_pad = _round_up(T, 8)
        tm = T_pad
    if T_pad != T:
        hs2d = jnp.pad(hs2d, ((0, T_pad - T), (0, 0)))
        in2d = jnp.pad(in2d, ((0, T_pad - T), (0, 0)))

    # bf16 matmul operands; everything else stays f32.
    hs_bf = hs2d.astype(jnp.bfloat16)
    w_bf = w.astype(jnp.bfloat16)

    b2d = b.reshape(1, H).astype(jnp.float32)
    g2d = gamma.reshape(1, H).astype(jnp.float32)
    be2d = beta.reshape(1, H).astype(jnp.float32)

    grid = (T_pad // tm,)

    # VMEM budget estimate (double-buffered streaming tiles + resident weight),
    # clamped to [32 MiB, 64 MiB] so it is valid on every generation (v7x has 64 MiB physical).
    tile_bytes = 2 * (tm * I * 2) + 2 * (tm * H * 4) + 2 * (tm * H * 4)
    resident_bytes = 2 * (I * H * 2) + 4 * (4 * H)
    vmem_limit = int(min(max(int(1.25 * (tile_bytes + resident_bytes)) + (2 << 20),
                             32 * 1024 * 1024),
                         64 * 1024 * 1024))

    flops = 2 * T_pad * I * H
    bytes_accessed = (T_pad * I * 2) + (T_pad * H * 4) + (I * H * 2) + (T_pad * H * 4) + 3 * H * 4

    out = pl.pallas_call(
        bert_output_kernel,
        out_shape=jax.ShapeDtypeStruct((T_pad, H), hidden_states.dtype),
        grid=grid,
        in_specs=[
            pl.BlockSpec((tm, I), lambda i: (i, 0)),    # hs tile: streamed
            pl.BlockSpec((tm, H), lambda i: (i, 0)),    # residual tile: streamed
            pl.BlockSpec((I, H), lambda i: (0, 0)),     # weight: VMEM-resident
            pl.BlockSpec((1, H), lambda i: (0, 0)),     # bias
            pl.BlockSpec((1, H), lambda i: (0, 0)),     # gamma
            pl.BlockSpec((1, H), lambda i: (0, 0)),     # beta
        ],
        out_specs=pl.BlockSpec((tm, H), lambda i: (i, 0)),
        compiler_params=pltpu.CompilerParams(
            dimension_semantics=("parallel",),
            vmem_limit_bytes=vmem_limit,
        ),
        cost_estimate=pl.CostEstimate(
            flops=flops, transcendentals=0, bytes_accessed=bytes_accessed),
    )(hs_bf, in2d, w_bf, b2d, g2d, be2d)

    # TODO(synk): if the bf16 weight ever exceeds the VMEM budget (very large I on v7x),
    # add a K grid axis with a f32 VMEM accumulator + pl.when init/finalize instead.

    return out[:T].reshape(B, S, H)


def reference_bf16(hidden_states, input_tensor, w, b, gamma, beta):
    """Matches the kernel's precision choices (bf16 matmul operands, f32 everywhere else)."""
    hs_bf = hidden_states.astype(jnp.bfloat16)
    w_bf = w.astype(jnp.bfloat16)
    x = jnp.einsum("bsi,ih->bsh", hs_bf, w_bf,
                   preferred_element_type=jnp.float32) + b
    y = x + input_tensor.astype(jnp.float32)
    mean = jnp.mean(y, axis=-1, keepdims=True)
    var = jnp.mean((y - mean) ** 2, axis=-1, keepdims=True)
    return (y - mean) * lax.rsqrt(var + LAYER_NORM_EPS) * gamma + beta


def reference_f32(hidden_states, input_tensor, w, b, gamma, beta):
    x = jnp.einsum("bsi,ih->bsh", hidden_states, w) + b
    y = x + input_tensor
    mean = jnp.mean(y, axis=-1, keepdims=True)
    var = jnp.mean((y - mean) ** 2, axis=-1, keepdims=True)
    return (y - mean) * lax.rsqrt(var + LAYER_NORM_EPS) * gamma + beta


if __name__ == "__main__":
    key = jax.random.PRNGKey(0)
    batch, seq = 2, 8
    intermediate_size, hidden_size = 64, 32

    k1, k2, k3, k4, k5, k6 = jax.random.split(key, 6)
    hidden_states = jax.random.normal(k1, (batch, seq, intermediate_size), jnp.float32)
    input_tensor = jax.random.normal(k2, (batch, seq, hidden_size), jnp.float32)

    # Deterministic "Linear" params (PyTorch weight [H, I] stored transposed as [I, H]).
    w = jax.random.normal(k3, (intermediate_size, hidden_size), jnp.float32) * 0.02
    b = jax.random.normal(k4, (hidden_size,), jnp.float32) * 0.02
    # LayerNorm affine params.
    gamma = jnp.ones((hidden_size,), jnp.float32) + 0.01 * jax.random.normal(k5, (hidden_size,))
    beta = 0.01 * jax.random.normal(k6, (hidden_size,), jnp.float32)

    out = bert_output(hidden_states, input_tensor, w, b, gamma, beta)
    out = jax.block_until_ready(out)

    assert out.shape == (batch, seq, hidden_size)

    # Tight check against a precision-matched reference (bf16 matmul operands).
    ref_bf = reference_bf16(hidden_states, input_tensor, w, b, gamma, beta)
    assert jnp.allclose(out, ref_bf, atol=1e-4, rtol=1e-4), "mismatch vs bf16-matched reference"

    # Loose sanity check against the full-f32 reference (bf16 rounding only).
    ref32 = reference_f32(hidden_states, input_tensor, w, b, gamma, beta)
    assert jnp.allclose(out, ref32, atol=1e-1, rtol=5e-2), "mismatch vs f32 reference"

    print("KERNEL_OK")
</pallas_src>

<mosaic_0001>
module attributes {stable_mosaic.version = 11 : i64} {
  func.func @bert_output_kernel(%arg0: i32, %arg1: memref<16x64xbf16, #tpu.memory_space<vmem>>, %arg2: memref<16x32xf32, #tpu.memory_space<vmem>>, %arg3: memref<64x32xbf16, #tpu.memory_space<vmem>>, %arg4: memref<1x32xf32, #tpu.memory_space<vmem>>, %arg5: memref<1x32xf32, #tpu.memory_space<vmem>>, %arg6: memref<1x32xf32, #tpu.memory_space<vmem>>, %arg7: memref<16x32xf32, #tpu.memory_space<vmem>>) attributes {dimension_semantics = [#tpu.dimension_semantics<parallel>], iteration_bounds = array<i64: 1>, scalar_prefetch = 0 : i64, scratch_operands = 0 : i64, tpu.core_type = #tpu.core_type<tc>, window_params = [{transform_indices = @transform_0, window_bounds = array<i64: 16, 64>}, {transform_indices = @transform_1, window_bounds = array<i64: 16, 32>}, {pipeline_mode = #tpu.pipeline_mode<synchronous>, transform_indices = @transform_2, window_bounds = array<i64: 64, 32>}, {pipeline_mode = #tpu.pipeline_mode<synchronous>, transform_indices = @transform_3, window_bounds = array<i64: 1, 32>}, {pipeline_mode = #tpu.pipeline_mode<synchronous>, transform_indices = @transform_4, window_bounds = array<i64: 1, 32>}, {pipeline_mode = #tpu.pipeline_mode<synchronous>, transform_indices = @transform_5, window_bounds = array<i64: 1, 32>}, {transform_indices = @transform_6, window_bounds = array<i64: 16, 32>}]} {
    %c0 = arith.constant 0 : index
    %c0_0 = arith.constant 0 : index
    %0 = vector.load %arg1[%c0, %c0_0] : memref<16x64xbf16, #tpu.memory_space<vmem>>, vector<16x64xbf16>
    %c0_1 = arith.constant 0 : index
    %c0_2 = arith.constant 0 : index
    %1 = vector.load %arg3[%c0_1, %c0_2] : memref<64x32xbf16, #tpu.memory_space<vmem>>, vector<64x32xbf16>
    %cst = arith.constant dense<0.000000e+00> : vector<16x32xf32>
    %2 = tpu.matmul %0, %1, %cst {dimension_numbers = #tpu.dot_dimension_numbers<[1], [0], [0], [1], [0, 0, 1, 1], [], []>} : vector<16x64xbf16>, vector<64x32xbf16>, vector<16x32xf32> -> vector<16x32xf32>
    %c0_3 = arith.constant 0 : index
    %c0_4 = arith.constant 0 : index
    %3 = vector.load %arg4[%c0_3, %c0_4] : memref<1x32xf32, #tpu.memory_space<vmem>>, vector<1x32xf32>
    %4 = vector.broadcast %3 : vector<1x32xf32> to vector<16x32xf32>
    %5 = arith.addf %2, %4 : vector<16x32xf32>
    %c0_5 = arith.constant 0 : index
    %c0_6 = arith.constant 0 : index
    %6 = vector.load %arg2[%c0_5, %c0_6] : memref<16x32xf32, #tpu.memory_space<vmem>>, vector<16x32xf32>
    %7 = arith.addf %5, %6 : vector<16x32xf32>
    %cst_7 = arith.constant dense<0.000000e+00> : vector<16xf32>
    %8 = vector.multi_reduction <add>, %7, %cst_7 [1] : vector<16x32xf32> to vector<16xf32>
    %9 = vector.shape_cast %8 : vector<16xf32> to vector<16x1xf32>
    %cst_8 = arith.constant 3.200000e+01 : f32
    %10 = vector.broadcast %cst_8 : f32 to vector<16x1xf32>
    %11 = arith.divf %9, %10 : vector<16x1xf32>
    %12 = vector.broadcast %11 : vector<16x1xf32> to vector<16x32xf32>
    %13 = arith.subf %7, %12 : vector<16x32xf32>
    %14 = arith.mulf %13, %13 : vector<16x32xf32>
    %cst_9 = arith.constant dense<0.000000e+00> : vector<16xf32>
    %15 = vector.multi_reduction <add>, %14, %cst_9 [1] : vector<16x32xf32> to vector<16xf32>
    %16 = vector.shape_cast %15 : vector<16xf32> to vector<16x1xf32>
    %cst_10 = arith.constant 3.200000e+01 : f32
    %17 = vector.broadcast %cst_10 : f32 to vector<16x1xf32>
    %18 = arith.divf %16, %17 : vector<16x1xf32>
    %cst_11 = arith.constant 9.99999996E-13 : f32
    %19 = vector.broadcast %cst_11 : f32 to vector<16x1xf32>
    %20 = arith.addf %18, %19 : vector<16x1xf32>
    %21 = math.rsqrt %20 : vector<16x1xf32>
    %22 = vector.broadcast %21 : vector<16x1xf32> to vector<16x32xf32>
    %23 = arith.mulf %13, %22 : vector<16x32xf32>
    %c0_12 = arith.constant 0 : index
    %c0_13 = arith.constant 0 : index
    %24 = vector.load %arg5[%c0_12, %c0_13] : memref<1x32xf32, #tpu.memory_space<vmem>>, vector<1x32xf32>
    %25 = vector.broadcast %24 : vector<1x32xf32> to vector<16x32xf32>
    %26 = arith.mulf %23, %25 : vector<16x32xf32>
    %c0_14 = arith.constant 0 : index
    %c0_15 = arith.constant 0 : index
    %27 = vector.load %arg6[%c0_14, %c0_15] : memref<1x32xf32, #tpu.memory_space<vmem>>, vector<1x32xf32>
    %28 = vector.broadcast %27 : vector<1x32xf32> to vector<16x32xf32>
    %29 = arith.addf %26, %28 : vector<16x32xf32>
    %c0_16 = arith.constant 0 : index
    %c0_17 = arith.constant 0 : index
    %30 = vector.load %arg7[%c0_16, %c0_17] : memref<16x32xf32, #tpu.memory_space<vmem>>, vector<16x32xf32>
    tpu.vector_store %arg7[%c0_16, %c0_17], %29 {strides = array<i32>} : memref<16x32xf32, #tpu.memory_space<vmem>>, vector<16x32xf32>,
    return
  }
  func.func @transform_0(%arg0: i32) -> (i32, i32) {
    %c0_i32 = arith.constant 0 : i32
    %c0_i32_0 = arith.constant 0 : i32
    return %arg0, %c0_i32 : i32, i32
  }
  func.func @transform_1(%arg0: i32) -> (i32, i32) {
    %c0_i32 = arith.constant 0 : i32
    %c0_i32_0 = arith.constant 0 : i32
    return %arg0, %c0_i32 : i32, i32
  }
  func.func @transform_2(%arg0: i32) -> (i32, i32) {
    %c0_i32 = arith.constant 0 : i32
    %c0_i32_0 = arith.constant 0 : i32
    %c0_i32_1 = arith.constant 0 : i32
    return %c0_i32, %c0_i32_0 : i32, i32
  }
  func.func @transform_3(%arg0: i32) -> (i32, i32) {
    %c0_i32 = arith.constant 0 : i32
    %c0_i32_0 = arith.constant 0 : i32
    %c0_i32_1 = arith.constant 0 : i32
    return %c0_i32, %c0_i32_0 : i32, i32
  }
  func.func @transform_4(%arg0: i32) -> (i32, i32) {
    %c0_i32 = arith.constant 0 : i32
    %c0_i32_0 = arith.constant 0 : i32
    %c0_i32_1 = arith.constant 0 : i32
    return %c0_i32, %c0_i32_0 : i32, i32
  }
  func.func @transform_5(%arg0: i32) -> (i32, i32) {
    %c0_i32 = arith.constant 0 : i32
    %c0_i32_0 = arith.constant 0 : i32
    %c0_i32_1 = arith.constant 0 : i32
    return %c0_i32, %c0_i32_0 : i32, i32
  }
  func.func @transform_6(%arg0: i32) -> (i32, i32) {
    %c0_i32 = arith.constant 0 : i32
    %c0_i32_0 = arith.constant 0 : i32
    return %arg0, %c0_i32 : i32, i32
  }
}

</mosaic_0001>

<llo_original>
// kernel: tpu_custom_call.1
$region0: #{tpu_custom_call.1}
  #allocation0 [shape = 'u32[]', space=smem, size = 0x4, offset = 0x4, fixed_abs, tag = 'smem constant byte address 0x4 - core index']
  #allocation1 [shape = 'u32[72,128]{1,0:T(1,128)}', space=vmem, size = 0x9000, scoped, tag = 'internal scratch']
  %s0 = inlined_call_operand.vmem [shape: bf16[16,64], index: 0, kind: input, shape index: {}]
  %s1 = inlined_call_operand.vmem [shape: f32[16,32], index: 1, kind: input, shape index: {}]
  %s2 = inlined_call_operand.vmem [shape: bf16[64,32], index: 2, kind: input, shape index: {}]
  %s3 = inlined_call_operand.vmem [shape: f32[1,32], index: 3, kind: input, shape index: {}]
  %s4 = inlined_call_operand.vmem [shape: f32[1,32], index: 4, kind: input, shape index: {}]
  %s5 = inlined_call_operand.vmem [shape: f32[1,32], index: 5, kind: input, shape index: {}]
  %s6 = inlined_call_operand.hbm [shape: f32[16,32], index: 6, kind: output, shape index: {}]
  %s7 = sld [smem:[#allocation0]]
  $region34: #{tpu_custom_call.1} parent=0
    _
  %s9 = ssub.s32 1, %s7
  %s10 = scalar_select 0, %s9, %s7
  $region1: #{tpu_custom_call.1} parent=0
    #allocation2 [shape = 'u8[8192]{0}', space=vmem, size = 0x2000, scoped, tag = 'output window, operand 0, single buffered']
    #allocation3 [shape = 's32[1]{0}', space=sflag, size = 0x4, scoped, tag = 'scoped memory for tpu_custom_call.1']
    %11 = vsyncpa [#allocation3], 0
    // Predicated region
    $region2: #{tpu_custom_call.1} parent=1 // pred_check
      _
    $region3: #{tpu_custom_call.1} parent=1 // pred_check_branch
      %13 = sbr.rel (0) target = $region5
    $region4: #{tpu_custom_call.1} parent=1 // pred_region
      _
    $region5: #{tpu_custom_call.1} parent=1 // pred_fallthru
      _
    // Predicated region
    $region6: #{tpu_custom_call.1} parent=1 // pred_check
      _
    $region7: #{tpu_custom_call.1} parent=1 // pred_check_branch
      %15 = sbr.rel (0) target = $region9
    $region8: #{tpu_custom_call.1} parent=1 // pred_region
      _
    $region9: #{tpu_custom_call.1} parent=1 // pred_fallthru
      _
    // Predicated region
    $region10: #{tpu_custom_call.1} parent=1 // pred_check
      _
    $region11: #{tpu_custom_call.1} parent=1 // pred_check_branch
      %17 = sbr.rel (0) target = $region13
    $region12: #{tpu_custom_call.1} parent=1 // pred_region
      _
    $region13: #{tpu_custom_call.1} parent=1 // pred_fallthru
      _
    // Predicated region
    $region14: #{tpu_custom_call.1} parent=1 // pred_check
      _
    $region15: #{tpu_custom_call.1} parent=1 // pred_check_branch
      %19 = sbr.rel (0) target = $region17
    $region16: #{tpu_custom_call.1} parent=1 // pred_region
      _
    $region17: #{tpu_custom_call.1} parent=1 // pred_fallthru
      _
    // Predicated region
    $region18: #{tpu_custom_call.1} parent=1 // pred_check
      _
    $region19: #{tpu_custom_call.1} parent=1 // pred_check_branch
      %21 = sbr.rel (0) target = $region21
    $region20: #{tpu_custom_call.1} parent=1 // pred_region
      _
    $region21: #{tpu_custom_call.1} parent=1 // pred_fallthru
      _
    // Predicated region
    $region22: #{tpu_custom_call.1} parent=1 // pred_check
      _
    $region23: #{tpu_custom_call.1} parent=1 // pred_check_branch
      %23 = sbr.rel (0) target = $region25
    $region24: #{tpu_custom_call.1} parent=1 // pred_region
      _
    $region25: #{tpu_custom_call.1} parent=1 // pred_fallthru
      _
    %v25 = vld [vmem:[%s0] sm:$0xf]
    %v26 = vld [vmem:[%s0 + $0x4] sm:$0xf]
    %v27 = vld [vmem:[%s2] sm:$0xf]
    %v28 = vld [vmem:[%s2 + $0x4] sm:$0xf]
    %v29 = vld [vmem:[%s2 + $0x8] sm:$0xf]
    %v30 = vld [vmem:[%s2 + $0xc] sm:$0xf]
    %v31 = vld [vmem:[%s2 + $0x10] sm:$0xf]
    %v32 = vld [vmem:[%s2 + $0x14] sm:$0xf]
    %v33 = vld [vmem:[%s2 + $0x18] sm:$0xf]
    %v34 = vld [vmem:[%s2 + $0x1c] sm:$0xf]
    %v35 = vld [vmem:[%s3] sm:$0x1]
    %v37 = vperm.slane %v35, 0
    %v41 = vunpack.c.l.b16 %v25
    %v42 = vunpack.c.l.b16 %v26
    %v43 = vpack.c.b16 %v42, %v41
    %v52 = vunpack.c.l.b16 %v27
    %v53 = vunpack.c.l.b16 %v28
    %v54 = vunpack.c.l.b16 %v29
    %v55 = vunpack.c.l.b16 %v30
    %v56 = vunpack.c.l.b16 %v31
    %v57 = vunpack.c.l.b16 %v32
    %v58 = vunpack.c.l.b16 %v33
    %v59 = vunpack.c.l.b16 %v34
    %v60 = vpack.c.b16 %v53, %v52
    %v61 = vpack.c.b16 %v55, %v54
    %v62 = vpack.c.b16 %v57, %v56
    %v63 = vpack.c.b16 %v59, %v58
    %vm68 = vcmask 523264
    %v70 = vsel %vm68, %v43, 0
    %72 = vmatpush.bf16.msra.mxu0 0
    %73 = vmatpush.bf16.msra.mxu0 0
    %74 = vmatpush.bf16.msra.mxu0 0
    %75 = vmatpush.bf16.msra.mxu0 0
    %76 = vmatpush.bf16.msra.mxu0 %v63
    %77 = vmatpush.bf16.msra.mxu0 %v62
    %78 = vmatpush.bf16.msra.mxu0 %v61
    %79 = vmatpush.bf16.msra.mxu0 %v60
    %80 = vmatmul.bf16.gmra.mxu0 %v70
    %v81 = vpop.f32.mrf.mxu0
    %v82 = vadd.f32 %v37, %v81
    %v83 = vpop.f32.mrf.mxu0
    %v84 = vadd.f32 %v37, %v83
    %85 = vdwg.mxu0
    %v86 = vld [vmem:[%s1] sm:$0xff]
    %v87 = vld [vmem:[%s1 + $0x8] sm:$0xff]
    %v88 = vadd.f32 %v82, %v86
    %v89 = vadd.f32 %v84, %v87
    %vm90 = vcmask 261120
    %v91 = vsel %vm90, %v88, 0.0
    %92 = vadd.xlane.f32.xlu0 %v91
    %v93 = vpop.xlane.xlu0 %92
    %v94 = vsel %vm90, %v89, 0.0
    %95 = vadd.xlane.f32.xlu0 %v94
    %v96 = vpop.xlane.xlu0 %95
    %v97 = vrcp.pop 32.0
    %v98 = vmul.f32 32.0, %v97
    %v99 = vsub.f32 1.0, %v98
    %v100 = vmul.f32 %v97, %v99
    %v101 = vadd.f32 %v97, %v100
    %vm102 = vweird.f32 %v97
    %v103 = vsel %vm102, %v97, %v101
    %v104 = vmul.f32 %v93, %v103
    %v105 = vmul.f32 %v96, %v103
    %v106 = vsub.f32 %v88, %v104
    %v107 = vsub.f32 %v89, %v105
    %v108 = vmul.f32 %v106, %v106
    %v109 = vmul.f32 %v107, %v107
    %v110 = vsel %vm90, %v108, 0.0
    %111 = vadd.xlane.f32.xlu0 %v110
    %v112 = vpop.xlane.xlu0 %111
    %v113 = vsel %vm90, %v109, 0.0
    %114 = vadd.xlane.f32.xlu0 %v113
    %v115 = vpop.xlane.xlu0 %114
    %v116 = vmul.f32 %v112, %v103
    %v117 = vmul.f32 %v115, %v103
    %v118 = vadd.f32 %v116, 1e-12
    %v119 = vadd.f32 %v117, 1e-12
    %v120 = vrsqrt.pop %v118
    %v121 = vmul.f32 %v120, %v118
    %v122 = vmul.f32 %v121, %v120
    %v123 = vmul.f32 0.5, %v122
    %v124 = vsub.f32 1.5, %v123
    %v125 = vmul.f32 %v120, %v124
    %vm126 = vweird.f32 %v118
    %vm127 = vweird.f32 %v120
    %vm128 = vmor %vm126, %vm127
    %v129 = vsel %vm128, %v120, %v125
    %v130 = vrsqrt.pop %v119
    %v131 = vmul.f32 %v130, %v119
    %v132 = vmul.f32 %v131, %v130
    %v133 = vmul.f32 0.5, %v132
    %v134 = vsub.f32 1.5, %v133
    %v135 = vmul.f32 %v130, %v134
    %vm136 = vweird.f32 %v119
    %vm137 = vweird.f32 %v130
    %vm138 = vmor %vm136, %vm137
    %v139 = vsel %vm138, %v130, %v135
    %v140 = vmul.f32 %v106, %v129
    %v141 = vmul.f32 %v107, %v139
    %v142 = vld [vmem:[%s4] sm:$0x1]
    %v144 = vperm.slane %v142, 0
    %v146 = vmul.f32 %v140, %v144
    %v147 = vmul.f32 %v141, %v144
    %v148 = vld [vmem:[%s5] sm:$0x1]
    %v150 = vperm.slane %v148, 0
    %v152 = vadd.f32 %v146, %v150
    %v153 = vadd.f32 %v147, %v150
    %154 = vst.msk [vmem:[#allocation2] sm:$0xff] %vm90, %v152
    %155 = vst.msk [vmem:[#allocation2 + $0x8] sm:$0xff] %vm90, %v153
    // Predicated region
    $region26: #{tpu_custom_call.1} parent=1 // pred_check
      _
    $region27: #{tpu_custom_call.1} parent=1 // pred_check_branch
      %157 = sbr.rel (0) target = $region29
    $region28: #{tpu_custom_call.1} parent=1 // pred_region
      %159 = vsyncadd [#allocation3], 0
      %s160 = sshll.u32 [#allocation2], 4
      %s161 = int_to_ptr.vmem [resolvable:$true] %s160
      %s162 = sshll.u32 %s6, 4
      %s163 = int_to_ptr.hbm [resolvable:$true] %s162
      %168 = dma.vmem_to_hbm [thread:$0]  %s161, 256, %s163, [#allocation3], 128, 128, 8
    $region29: #{tpu_custom_call.1} parent=1 // pred_fallthru
      _
    // Predicated region
    $region30: #{tpu_custom_call.1} parent=1 // pred_check
      _
    $region31: #{tpu_custom_call.1} parent=1 // pred_check_branch
      %170 = sbr.rel (0) target = $region33
    $region32: #{tpu_custom_call.1} parent=1 // pred_region
      %172 = dma.done [#allocation3], 256
    $region33: #{tpu_custom_call.1} parent=1 // pred_fallthru
      _
    %173 = vsyncpa [#allocation3], 1

</llo_original>
